<compile_context>
chip_gen: v7x
topology: tpu7x:2x2x1
jax: 0.10.0
libtpu: 0.0.40
codegen_flags: <defaults>
</compile_context>

<pallas_src>
import functools

import jax
import jax.numpy as jnp
from jax.experimental import pallas as pl
from jax.experimental.pallas import tpu as pltpu


def _ce_label_smooth_kernel(logits_ref, targets_ref, out_ref, *,
                            epsilon: float, num_classes: int,
                            batch: int, block_rows: int):
    """One batch tile: (block_rows, C) logits -> one lane-dense partial sum."""
    i = pl.program_id(0)

    x = logits_ref[...].astype(jnp.float32)      # promote in-register only
    t = targets_ref[...]                         # (TN, 1) int32

    # Closed-form label-smoothed CE pieces; log_probs never materialized.
    m = jnp.max(x, axis=1, keepdims=True)                      # (TN, 1)
    sum_x = jnp.sum(x, axis=1, keepdims=True)                  # (TN, 1)

    # gather x[r, t_r]: (1, C) iota broadcast against (TN, 1) targets
    col = jax.lax.broadcasted_iota(jnp.int32, (1, num_classes), 1)
    x_t = jnp.sum(jnp.where(col == t, x, 0.0), axis=1, keepdims=True)

    # (x - m) has exp as its only consumer; exp/LSE kept in f32 on all chips.
    lse = jnp.log(jnp.sum(jnp.exp(x - m), axis=1, keepdims=True))  # (TN, 1)

    c = float(num_classes)
    coef_t = 1.0 - float(epsilon)           # weight on the target log-prob
    coef_u = float(epsilon) / c             # uniform smoothing weight
    #   loss_r = -(1-eps)*log p_t - (eps/C)*sum_j log p_j
    #          = -(1-eps)*(x_t - m - lse) - (eps/C)*(sum_x - C*(m + lse))
    row_loss = (-coef_t * (x_t - m - lse)
                - coef_u * (sum_x - c * (m + lse)))             # (TN, 1)

    # Mask rows past the end of the (unpadded) batch in the last partial tile.
    # Must happen before the per-tile reduction (padded rows are unspecified).
    row_idx = i * block_rows + jax.lax.broadcasted_iota(
        jnp.int32, (block_rows, 1), 0)
    row_loss = jnp.where(row_idx < batch, row_loss, 0.0)

    # One partial sum per tile, written lane-dense; wrapper reads [:, 0, 0].
    tile_sum = jnp.sum(row_loss, axis=0, keepdims=True)         # (1, 1)
    out_ref[...] = jnp.broadcast_to(tile_sum.reshape(1, 1, 1), out_ref.shape)


def _vmem_budget_bytes() -> int:
    """~75% of the chip's physical VMEM; conservative 64 MiB (v7x) fallback."""
    cap = 64 << 20
    try:
        info = pltpu.get_tpu_info()
        cap_attr = getattr(info, "vmem_capacity_bytes", None)
        if cap_attr:
            cap = int(cap_attr)
    except Exception:
        pass
    return (3 * cap) // 4


def cross_entropy_label_smooth(logits, targets, epsilon: float = 0.1,
                               block_rows=None):
    """logits: (N, C) float (f32 or bf16); targets: (N,) int. Scalar f32 loss."""
    N, C = logits.shape
    itemsize = jnp.dtype(logits.dtype).itemsize
    row_align = 16 if itemsize < 4 else 8   # bf16 packs 16 rows per vreg group

    budget = _vmem_budget_bytes()
    # 2 double-buffered input tiles (input dtype) + ~4 live f32 temporaries.
    per_row_bytes = C * (2 * itemsize + 4 * 4)

    if block_rows is None:
        tn = budget // per_row_bytes
        # Keep >= 2 grid steps when the batch allows it so the "parallel"
        # batch axis can shard across v7x's two TensorCores (no-op on 1 TC).
        if N >= 2 * row_align:
            tn = min(tn, ((N // 2) // row_align) * row_align)
    else:
        tn = int(block_rows)
    tn = int(max(1, min(tn, 32768, N)))
    if tn < N:
        tn = max(row_align, (tn // row_align) * row_align)
        tn = min(tn, N)
    # (tn == N is always a legal full-dim block regardless of alignment.)

    num_tiles = int(pl.cdiv(N, tn))

    targets_2d = targets.astype(jnp.int32).reshape(N, 1)

    kernel = functools.partial(
        _ce_label_smooth_kernel, epsilon=float(epsilon),
        num_classes=int(C), batch=int(N), block_rows=int(tn))

    cost = pl.CostEstimate(
        flops=int(6 * N * C),
        transcendentals=int(N * C),
        bytes_accessed=int(N * C * itemsize + N * 4 + num_tiles * 8 * 128 * 4),
    )

    # TODO(synk): for very large vocabularies (C >~ 64K, esp. on v7x's 64 MiB
    # VMEM) additionally tile the class axis with an online max/logsumexp.
    partials = pl.pallas_call(
        kernel,
        out_shape=jax.ShapeDtypeStruct((num_tiles, 8, 128), jnp.float32),
        grid_spec=pltpu.PrefetchScalarGridSpec(
            num_scalar_prefetch=0,
            grid=(num_tiles,),
            in_specs=[
                pl.BlockSpec((tn, C), lambda i: (i, 0)),   # logits tile
                pl.BlockSpec((tn, 1), lambda i: (i, 0)),   # targets tile
            ],
            out_specs=pl.BlockSpec((1, 8, 128), lambda i: (i, 0, 0)),
        ),
        compiler_params=pltpu.CompilerParams(
            dimension_semantics=("parallel",),
            vmem_limit_bytes=int(budget)),
        cost_estimate=cost,
    )(logits, targets_2d)

    # (-smooth * log_probs).mean(0).sum() == sum(per-row loss) / N
    return jnp.sum(partials[:, 0, 0]) / jnp.float32(N)


def _reference(logits, targets, epsilon=0.1):
    # pure-JAX reference of the PyTorch forward
    _, C = logits.shape
    lp = jax.nn.log_softmax(logits.astype(jnp.float32), axis=1)
    onehot = jax.nn.one_hot(targets, C, dtype=jnp.float32)
    smooth = (1.0 - epsilon) * onehot + epsilon / C
    return jnp.sum(jnp.mean(-smooth * lp, axis=0))


if __name__ == "__main__":
    key = jax.random.PRNGKey(0)
    k1, k2, k3, k4, k5, k6 = jax.random.split(key, 6)

    # 1) basic small case (single full-dim block), f32
    N, C = 8, 32
    logits = jax.random.normal(k1, (N, C), dtype=jnp.float32)
    targets = jax.random.randint(k2, (N,), 0, C, dtype=jnp.int32)
    loss = jax.block_until_ready(cross_entropy_label_smooth(logits, targets))
    ref = _reference(logits, targets)
    assert jnp.allclose(loss, ref, atol=1e-5, rtol=1e-5), (loss, ref)

    # 2) multi-tile grid, masked partial last tile, NO logits padding, f32
    N2, C2 = 20, 48
    logits2 = jax.random.normal(k3, (N2, C2), dtype=jnp.float32)
    targets2 = jax.random.randint(k4, (N2,), 0, C2, dtype=jnp.int32)
    loss2 = jax.block_until_ready(
        cross_entropy_label_smooth(logits2, targets2, epsilon=0.1, block_rows=8))
    ref2 = _reference(logits2, targets2, epsilon=0.1)
    assert jnp.allclose(loss2, ref2, atol=1e-5, rtol=1e-5), (loss2, ref2)

    # 3) bf16 logits stay bf16 on the DMA path, promoted in-register
    logits3 = logits.astype(jnp.bfloat16)
    loss3 = jax.block_until_ready(cross_entropy_label_smooth(logits3, targets))
    ref3 = _reference(logits3.astype(jnp.float32), targets)
    assert jnp.allclose(loss3, ref3, atol=1e-5, rtol=1e-5), (loss3, ref3)

    # 4) bf16, auto tile heuristic: 16-row alignment, >=2 tiles, partial tail
    N4, C4 = 300, 256
    logits4 = jax.random.normal(k5, (N4, C4), dtype=jnp.float32).astype(jnp.bfloat16)
    targets4 = jax.random.randint(k6, (N4,), 0, C4, dtype=jnp.int32)
    loss4 = jax.block_until_ready(cross_entropy_label_smooth(logits4, targets4))
    ref4 = _reference(logits4.astype(jnp.float32), targets4)
    assert jnp.allclose(loss4, ref4, atol=1e-4, rtol=1e-4), (loss4, ref4)

    print("KERNEL_OK")
</pallas_src>

<mosaic_0001>
module attributes {stable_mosaic.version = 11 : i64} {
  func.func @_ce_label_smooth_kernel(%arg0: i32, %arg1: memref<8x32xf32, #tpu.memory_space<vmem>>, %arg2: memref<8x1xi32, #tpu.memory_space<vmem>>, %arg3: memref<1x8x128xf32, #tpu.memory_space<vmem>>) attributes {dimension_semantics = [#tpu.dimension_semantics<parallel>], iteration_bounds = array<i64: 1>, scalar_prefetch = 0 : i64, scratch_operands = 0 : i64, tpu.core_type = #tpu.core_type<tc>, window_params = [{transform_indices = @transform_0, window_bounds = array<i64: 8, 32>}, {transform_indices = @transform_1, window_bounds = array<i64: 8, 1>}, {transform_indices = @transform_2, window_bounds = array<i64: 1, 8, 128>}]} {
    %c0 = arith.constant 0 : index
    %c0_0 = arith.constant 0 : index
    %0 = vector.load %arg1[%c0, %c0_0] : memref<8x32xf32, #tpu.memory_space<vmem>>, vector<8x32xf32>
    %c0_1 = arith.constant 0 : index
    %c0_2 = arith.constant 0 : index
    %1 = vector.load %arg2[%c0_1, %c0_2] : memref<8x1xi32, #tpu.memory_space<vmem>>, vector<8x1xi32>
    %cst = arith.constant dense<0xFF800000> : vector<8xf32>
    %2 = vector.multi_reduction <maximumf>, %0, %cst [1] : vector<8x32xf32> to vector<8xf32>
    %3 = vector.shape_cast %2 : vector<8xf32> to vector<8x1xf32>
    %cst_3 = arith.constant dense<0.000000e+00> : vector<8xf32>
    %4 = vector.multi_reduction <add>, %0, %cst_3 [1] : vector<8x32xf32> to vector<8xf32>
    %5 = vector.shape_cast %4 : vector<8xf32> to vector<8x1xf32>
    %6 = tpu.iota {dimensions = array<i32: 1>} : vector<1x32xi32>
    %7 = vector.broadcast %6 : vector<1x32xi32> to vector<8x32xi32>
    %8 = vector.broadcast %1 : vector<8x1xi32> to vector<8x32xi32>
    %9 = arith.cmpi eq, %7, %8 : vector<8x32xi32>
    %cst_4 = arith.constant 0.000000e+00 : f32
    %10 = vector.broadcast %cst_4 : f32 to vector<8x32xf32>
    %11 = arith.select %9, %0, %10 : vector<8x32xi1>, vector<8x32xf32>
    %cst_5 = arith.constant dense<0.000000e+00> : vector<8xf32>
    %12 = vector.multi_reduction <add>, %11, %cst_5 [1] : vector<8x32xf32> to vector<8xf32>
    %13 = vector.shape_cast %12 : vector<8xf32> to vector<8x1xf32>
    %14 = vector.broadcast %3 : vector<8x1xf32> to vector<8x32xf32>
    %15 = arith.subf %0, %14 : vector<8x32xf32>
    %16 = math.exp %15 : vector<8x32xf32>
    %cst_6 = arith.constant dense<0.000000e+00> : vector<8xf32>
    %17 = vector.multi_reduction <add>, %16, %cst_6 [1] : vector<8x32xf32> to vector<8xf32>
    %18 = vector.shape_cast %17 : vector<8xf32> to vector<8x1xf32>
    %19 = math.log %18 : vector<8x1xf32>
    %20 = arith.subf %13, %3 : vector<8x1xf32>
    %21 = arith.subf %20, %19 : vector<8x1xf32>
    %cst_7 = arith.constant -0.899999976 : f32
    %22 = vector.broadcast %cst_7 : f32 to vector<8x1xf32>
    %23 = arith.mulf %22, %21 : vector<8x1xf32>
    %24 = arith.addf %3, %19 : vector<8x1xf32>
    %cst_8 = arith.constant 3.200000e+01 : f32
    %25 = vector.broadcast %cst_8 : f32 to vector<8x1xf32>
    %26 = arith.mulf %25, %24 : vector<8x1xf32>
    %27 = arith.subf %5, %26 : vector<8x1xf32>
    %cst_9 = arith.constant 3.125000e-03 : f32
    %28 = vector.broadcast %cst_9 : f32 to vector<8x1xf32>
    %29 = arith.mulf %28, %27 : vector<8x1xf32>
    %30 = arith.subf %23, %29 : vector<8x1xf32>
    %c8_i32 = arith.constant 8 : i32
    %31 = arith.muli %arg0, %c8_i32 : i32
    %32 = tpu.iota {dimensions = array<i32: 0>} : vector<8x1xi32>
    %33 = vector.broadcast %31 : i32 to vector<8x1xi32>
    %34 = arith.addi %33, %32 : vector<8x1xi32>
    %c8_i32_10 = arith.constant 8 : i32
    %35 = vector.broadcast %c8_i32_10 : i32 to vector<8x1xi32>
    %36 = arith.cmpi slt, %34, %35 : vector<8x1xi32>
    %cst_11 = arith.constant 0.000000e+00 : f32
    %37 = vector.broadcast %cst_11 : f32 to vector<8x1xf32>
    %38 = arith.select %36, %30, %37 : vector<8x1xi1>, vector<8x1xf32>
    %cst_12 = arith.constant dense<0.000000e+00> : vector<1xf32>
    %39 = vector.multi_reduction <add>, %38, %cst_12 [0] : vector<8x1xf32> to vector<1xf32>
    %40 = vector.shape_cast %39 : vector<1xf32> to vector<1x1xf32>
    %41 = vector.shape_cast %40 : vector<1x1xf32> to vector<1x1x1xf32>
    %42 = vector.shape_cast %41 : vector<1x1x1xf32> to vector<1x1x1xf32>
    %43 = vector.broadcast %42 : vector<1x1x1xf32> to vector<1x8x128xf32>
    %c0_13 = arith.constant 0 : index
    %c0_14 = arith.constant 0 : index
    %c0_15 = arith.constant 0 : index
    %44 = vector.load %arg3[%c0_13, %c0_14, %c0_15] : memref<1x8x128xf32, #tpu.memory_space<vmem>>, vector<1x8x128xf32>
    tpu.vector_store %arg3[%c0_13, %c0_14, %c0_15], %43 {strides = array<i32>} : memref<1x8x128xf32, #tpu.memory_space<vmem>>, vector<1x8x128xf32>,
    return
  }
  func.func @transform_0(%arg0: i32) -> (i32, i32) {
    %c0_i32 = arith.constant 0 : i32
    %c0_i32_0 = arith.constant 0 : i32
    return %arg0, %c0_i32 : i32, i32
  }
  func.func @transform_1(%arg0: i32) -> (i32, i32) {
    %c0_i32 = arith.constant 0 : i32
    %c0_i32_0 = arith.constant 0 : i32
    return %arg0, %c0_i32 : i32, i32
  }
  func.func @transform_2(%arg0: i32) -> (i32, i32, i32) {
    %c0_i32 = arith.constant 0 : i32
    %c0_i32_0 = arith.constant 0 : i32
    %c0_i32_1 = arith.constant 0 : i32
    return %arg0, %c0_i32, %c0_i32_0 : i32, i32, i32
  }
}

</mosaic_0001>

<llo_original>
// kernel: tpu_custom_call.1
$region0: #{tpu_custom_call.1}
  #allocation0 [shape = 'u32[]', space=smem, size = 0x4, offset = 0x4, fixed_abs, tag = 'smem constant byte address 0x4 - core index']
  #allocation1 [shape = 'u32[144,128]{1,0:T(1,128)}', space=vmem, size = 0x12000, scoped, tag = 'internal scratch']
  %s0 = inlined_call_operand.vmem [shape: f32[8,32], index: 0, kind: input, shape index: {}]
  %s1 = inlined_call_operand.vmem [shape: s32[8,1], index: 1, kind: input, shape index: {}]
  %s2 = inlined_call_operand.hbm [shape: f32[1,8,128], index: 2, kind: output, shape index: {}]
  %s3 = sld [smem:[#allocation0]]
  $region18: #{tpu_custom_call.1} parent=0
    _
  %s5 = ssub.s32 1, %s3
  %s6 = scalar_select 0, %s5, %s3
  $region1: #{tpu_custom_call.1} parent=0
    #allocation2 [shape = 'u8[4096]{0}', space=vmem, size = 0x1000, scoped, tag = 'output window, operand 0, single buffered']
    #allocation3 [shape = 's32[1]{0}', space=sflag, size = 0x4, scoped, tag = 'scoped memory for tpu_custom_call.1']
    %7 = vsyncpa [#allocation3], 0
    // Predicated region
    $region2: #{tpu_custom_call.1} parent=1 // pred_check
      _
    $region3: #{tpu_custom_call.1} parent=1 // pred_check_branch
      %9 = sbr.rel (0) target = $region5
    $region4: #{tpu_custom_call.1} parent=1 // pred_region
      _
    $region5: #{tpu_custom_call.1} parent=1 // pred_fallthru
      _
    // Predicated region
    $region6: #{tpu_custom_call.1} parent=1 // pred_check
      _
    $region7: #{tpu_custom_call.1} parent=1 // pred_check_branch
      %11 = sbr.rel (0) target = $region9
    $region8: #{tpu_custom_call.1} parent=1 // pred_region
      _
    $region9: #{tpu_custom_call.1} parent=1 // pred_fallthru
      _
    %v12 = vld [vmem:[%s0] sm:$0xff]
    %v13 = vld [vmem:[%s1] sm:$0xff]
    %vm14 = vcmask 261120
    %v15 = vsel %vm14, %v12, -inf
    %16 = vmax.xlane.f32.xlu0 %v15
    %v17 = vpop.xlane.xlu0 %16
    %v18 = vsel %vm14, %v12, 0.0
    %19 = vadd.xlane.f32.xlu0 %v18
    %v20 = vpop.xlane.xlu0 %19
    %v21 = vlaneseq
    %v22 = vand.u32 %v21, 127
    %23 = vset.pattern.permute.xlu0 0
    %24 = vperm.xlu0 %23, %v13
    %v25 = vpop.permute.xlu0 %24
    %vm26 = vcmp.eq.s32.totalorder %v22, %v25
    %v27 = vsel %vm26, %v12, 0.0
    %v28 = vsel %vm14, %v27, 0.0
    %29 = vadd.xlane.f32.xlu0 %v28
    %v30 = vpop.xlane.xlu0 %29
    %v31 = vsub.f32 %v12, %v17
    %v32 = vmul.f32 %v31, 1.442695
    %v33 = vpow.pop %v32
    %v34 = vsel %vm14, %v33, 0.0
    %35 = vadd.xlane.f32.xlu0 %v34
    %v36 = vpop.xlane.xlu0 %35
    %v37 = vlog2.pop %v36
    %v38 = vmul.f32 %v37, 0.6931472
    %v39 = vsub.f32 %v30, %v17
    %v40 = vsub.f32 %v39, %v38
    %v41 = vmul.f32 %v40, -0.9
    %v42 = vadd.f32 %v17, %v38
    %v43 = vmul.f32 %v42, 32.0
    %v44 = vsub.f32 %v20, %v43
    %v45 = vmul.f32 %v44, 0.003125
    %v46 = vsub.f32 %v41, %v45
    %s47 = smul.u32 0, 8
    %v48 = vlaneseq
    %v49 = vshrl.u32 %v48, 7
    %v50 = vstv %s47
    %v51 = vadd.s32 %v50, %v49
    %vm52 = vcmp.lt.s32.totalorder %v51, 8
    %v53 = vsel %vm52, %v46, 0.0
    %v54 = vrot.slane %v53, 4
    %v55 = vadd.f32 %v53, %v54
    %v56 = vrot.slane %v55, 2
    %v57 = vadd.f32 %v55, %v56
    %v58 = vrot.slane %v57, 1
    %v59 = vadd.f32 %v57, %v58
    %60 = vst [vmem:[#allocation2] sm:$0xff] %v59
    // Predicated region
    $region10: #{tpu_custom_call.1} parent=1 // pred_check
      _
    $region11: #{tpu_custom_call.1} parent=1 // pred_check_branch
      %62 = sbr.rel (0) target = $region13
    $region12: #{tpu_custom_call.1} parent=1 // pred_region
      %s64 = ssub.s32 128, 128
      %65 = vsyncadd [#allocation3], %s64
      %s67 = sshll.u32 [#allocation2], 4
      %s68 = int_to_ptr.vmem [resolvable:$true] %s67
      %70 = dma.vmem_to_hbm [thread:$0]  %s68, 128, %s2, [#allocation3]
    $region13: #{tpu_custom_call.1} parent=1 // pred_fallthru
      _
    // Predicated region
    $region14: #{tpu_custom_call.1} parent=1 // pred_check
      _
    $region15: #{tpu_custom_call.1} parent=1 // pred_check_branch
      %72 = sbr.rel (0) target = $region17
    $region16: #{tpu_custom_call.1} parent=1 // pred_region
      %73 = dma.done [#allocation3], 128
    $region17: #{tpu_custom_call.1} parent=1 // pred_fallthru
      _
    %74 = vsyncpa [#allocation3], 1

</llo_original>
